<compile_context>
chip_gen: v7x
topology: tpu7x:2x2x1
jax: 0.10.0
libtpu: 0.0.40
codegen_flags: <defaults>
</compile_context>

<pallas_src>
import functools

import jax
import jax.numpy as jnp
from jax.experimental import pallas as pl
from jax.experimental.pallas import tpu as pltpu


def _ln_nchw_kernel(x_ref, w_ref, b_ref, o_ref, *, inv_c, eps):
    # x_ref: (TB, C, TN) tile; w_ref / b_ref: (1, C, 1); normalize over axis=1.
    x = x_ref[...].astype(jnp.float32)
    mu = jnp.sum(x, axis=1, keepdims=True) * inv_c            # mean
    xc = x - mu
    var = jnp.sum(xc * xc, axis=1, keepdims=True) * inv_c     # unbiased=False
    inv = jax.lax.rsqrt(var + eps)
    w = w_ref[...].astype(jnp.float32)
    b = b_ref[...].astype(jnp.float32)
    # Fused scale/shift written directly to the output (no extra temporaries).
    # Two-pass mean/var kept on purpose: E[x^2]-E[x]^2 is less stable and the
    # VPU work is fully hidden behind DMA on every generation.
    o_ref[...] = (xc * inv * w + b).astype(o_ref.dtype)


def _round_up(v, m):
    return ((v + m - 1) // m) * m


def _largest_divisor_leq(n, cap):
    cap = max(1, min(n, cap))
    for d in range(cap, 0, -1):
        if n % d == 0:
            return d
    return 1


def _vmem_budget():
    """Generation-aware (vmem_limit_bytes, target_tile_bytes)."""
    try:
        cap = int(pltpu.get_tpu_info().vmem_capacity_bytes)
    except Exception:
        cap = 64 << 20  # conservative: v7x per-TC physical VMEM
    vmem_limit = min(cap // 2, 64 << 20)        # 64 MiB on v5e/v6e, 32 MiB on v7x
    # Double-buffered in + out = ~4x tile; leave headroom for residents/scratch.
    target_tile = min(max(vmem_limit // 8, 2 << 20), 8 << 20)
    return vmem_limit, target_tile


def _choose_tiling(b_, c, hw, dtype_bytes, target_tile_bytes):
    """Pick (batch tile, lane tile).

    Lane tile is a multiple of 128 or the full H*W extent; batch tile divides
    B exactly (no partial tail blocks on the leading axis).
    """
    per_col = max(1, c * dtype_bytes)
    tn = (target_tile_bytes // per_col) // 128 * 128
    if tn >= hw:
        # Whole H*W fits in one block: also block the batch dim so tiny ORB
        # feature maps need only a couple of grid steps.
        tn = hw
        per_slice = max(1, c * hw * dtype_bytes)
        tb = _largest_divisor_leq(b_, target_tile_bytes // per_slice)
    else:
        tn = max(tn, 128)
        tb = 1

    def n_steps(tb_, tn_):
        return pl.cdiv(b_, tb_) * pl.cdiv(hw, tn_)

    # Megacore (v7x): guarantee >= 2 total grid steps, ideally even, based on
    # the *total* step count. No effect on single-TC v5e/v6e beyond one extra
    # ~0.35 us step.
    if n_steps(tb, tn) < 2:
        if b_ >= 2:
            tb = _largest_divisor_leq(b_, b_ // 2)
        elif hw >= 256:
            tn = min(_round_up(pl.cdiv(hw, 2), 128), hw)
    if n_steps(tb, tn) % 2 == 1 and pl.cdiv(hw, tn) == 1 and hw >= 256:
        # e.g. B=3 with a single lane tile (3 steps, 2:1 TC imbalance):
        # split the lane axis so the total step count is even.
        tn = min(_round_up(pl.cdiv(hw, 2), 128), hw)
    return tb, tn


def withbias_layernorm_nchw(x, weight, bias, *, eps=1e-5,
                            target_tile_bytes=None, vmem_limit_bytes=None):
    """Equivalent of to_4d(WithBias_LayerNorm(to_3d(x))) for NCHW x.

    x: (B, C, H, W); weight, bias: (C,). Normalizes each pixel over C with
    biased variance and eps=1e-5, then applies the affine weight/bias.
    Accepts f32 or bf16 activations; internal math is always f32.
    """
    b_, c, h, w = x.shape
    hw = h * w
    assert weight.shape == (c,) and bias.shape == (c,)

    auto_limit, auto_tile = _vmem_budget()
    if vmem_limit_bytes is None:
        vmem_limit_bytes = auto_limit
    if target_tile_bytes is None:
        target_tile_bytes = auto_tile

    x3 = x.reshape(b_, c, hw)          # contiguous view, no data movement
    w3 = weight.reshape(1, c, 1)
    b3 = bias.reshape(1, c, 1)

    dtype_bytes = jnp.dtype(x.dtype).itemsize
    tb, tn = _choose_tiling(b_, c, hw, dtype_bytes, target_tile_bytes)
    # No jnp.pad: grid uses cdiv and the partial tail block's out-of-bounds
    # lanes are dropped on store; each output column only depends on its own
    # channel slice, so padded-lane garbage never contaminates valid results.
    grid = (pl.cdiv(b_, tb), pl.cdiv(hw, tn))

    kernel = functools.partial(_ln_nchw_kernel, inv_c=1.0 / c, eps=eps)
    out = pl.pallas_call(
        kernel,
        out_shape=jax.ShapeDtypeStruct((b_, c, hw), x.dtype),
        grid_spec=pltpu.PrefetchScalarGridSpec(
            num_scalar_prefetch=0,
            grid=grid,
            in_specs=[
                pl.BlockSpec((tb, c, tn), lambda i, j: (i, 0, j)),
                pl.BlockSpec((1, c, 1), lambda i, j: (0, 0, 0)),   # resident
                pl.BlockSpec((1, c, 1), lambda i, j: (0, 0, 0)),   # resident
            ],
            out_specs=pl.BlockSpec((tb, c, tn), lambda i, j: (i, 0, j)),
        ),
        compiler_params=pltpu.CompilerParams(
            dimension_semantics=("parallel", "parallel"),
            vmem_limit_bytes=vmem_limit_bytes,
        ),
    )(x3, w3, b3)
    return out.reshape(b_, c, h, w)


def _reference_nchw(x, weight, bias, eps=1e-5):
    # Pure-JAX reference: to_4d(WithBias_LayerNorm(to_3d(x))) collapses to a
    # per-pixel channel LayerNorm (biased variance, eps inside the sqrt).
    mu = jnp.mean(x, axis=1, keepdims=True)
    var = jnp.mean((x - mu) ** 2, axis=1, keepdims=True)
    y = (x - mu) / jnp.sqrt(var + eps)
    return y * weight.reshape(1, -1, 1, 1) + bias.reshape(1, -1, 1, 1)


if __name__ == "__main__":
    key = jax.random.PRNGKey(0)
    B, C, H, W = 2, 32, 16, 16      # ORB with n_feat=32 on a 16x16 feature map

    kx, kw, kb = jax.random.split(key, 3)
    x = jax.random.normal(kx, (B, C, H, W), dtype=jnp.float32)

    # 1) Parameters exactly as the module initializes them.
    weight = jnp.ones((C,), dtype=jnp.float32)   # torch.ones(normalized_shape)
    bias = jnp.zeros((C,), dtype=jnp.float32)    # torch.zeros(normalized_shape)
    out = jax.block_until_ready(withbias_layernorm_nchw(x, weight, bias))
    ref = _reference_nchw(x, weight, bias)
    assert out.shape == x.shape
    assert jnp.allclose(out, ref, atol=1e-5, rtol=1e-5)

    # 2) Non-trivial affine parameters to exercise the scale/shift path.
    weight2 = jax.random.normal(kw, (C,), dtype=jnp.float32)
    bias2 = jax.random.normal(kb, (C,), dtype=jnp.float32)
    out2 = jax.block_until_ready(withbias_layernorm_nchw(x, weight2, bias2))
    ref2 = _reference_nchw(x, weight2, bias2)
    assert jnp.allclose(out2, ref2, atol=1e-5, rtol=1e-5)

    # 3) bf16 I/O path (halves HBM bytes; internal math stays f32).
    x16 = x.astype(jnp.bfloat16)
    out3 = jax.block_until_ready(
        withbias_layernorm_nchw(x16, weight2.astype(jnp.bfloat16),
                                bias2.astype(jnp.bfloat16)))
    ref3 = _reference_nchw(x16.astype(jnp.float32), weight2, bias2)
    assert out3.dtype == jnp.bfloat16
    assert jnp.allclose(out3.astype(jnp.float32), ref3, atol=5e-2, rtol=5e-2)

    print("KERNEL_OK")
</pallas_src>

<mosaic_0001>
module attributes {stable_mosaic.version = 11 : i64} {
  func.func @_ln_nchw_kernel(%arg0: i32, %arg1: i32, %arg2: memref<1x32x256xf32, #tpu.memory_space<vmem>>, %arg3: memref<1x32x1xf32, #tpu.memory_space<vmem>>, %arg4: memref<1x32x1xf32, #tpu.memory_space<vmem>>, %arg5: memref<1x32x256xf32, #tpu.memory_space<vmem>>) attributes {dimension_semantics = [#tpu.dimension_semantics<parallel>, #tpu.dimension_semantics<parallel>], iteration_bounds = array<i64: 2, 1>, scalar_prefetch = 0 : i64, scratch_operands = 0 : i64, tpu.core_type = #tpu.core_type<tc>, window_params = [{transform_indices = @transform_0, window_bounds = array<i64: 1, 32, 256>}, {pipeline_mode = #tpu.pipeline_mode<synchronous>, transform_indices = @transform_1, window_bounds = array<i64: 1, 32, 1>}, {pipeline_mode = #tpu.pipeline_mode<synchronous>, transform_indices = @transform_2, window_bounds = array<i64: 1, 32, 1>}, {transform_indices = @transform_3, window_bounds = array<i64: 1, 32, 256>}]} {
    %c0 = arith.constant 0 : index
    %c0_0 = arith.constant 0 : index
    %c0_1 = arith.constant 0 : index
    %0 = vector.load %arg2[%c0, %c0_0, %c0_1] : memref<1x32x256xf32, #tpu.memory_space<vmem>>, vector<1x32x256xf32>
    %cst = arith.constant dense<0.000000e+00> : vector<1x256xf32>
    %1 = vector.multi_reduction <add>, %0, %cst [1] : vector<1x32x256xf32> to vector<1x256xf32>
    %2 = vector.shape_cast %1 : vector<1x256xf32> to vector<1x1x256xf32>
    %cst_2 = arith.constant 3.125000e-02 : f32
    %3 = vector.broadcast %cst_2 : f32 to vector<1x1x256xf32>
    %4 = arith.mulf %2, %3 : vector<1x1x256xf32>
    %5 = vector.broadcast %4 : vector<1x1x256xf32> to vector<1x32x256xf32>
    %6 = arith.subf %0, %5 : vector<1x32x256xf32>
    %7 = arith.mulf %6, %6 : vector<1x32x256xf32>
    %cst_3 = arith.constant dense<0.000000e+00> : vector<1x256xf32>
    %8 = vector.multi_reduction <add>, %7, %cst_3 [1] : vector<1x32x256xf32> to vector<1x256xf32>
    %9 = vector.shape_cast %8 : vector<1x256xf32> to vector<1x1x256xf32>
    %cst_4 = arith.constant 3.125000e-02 : f32
    %10 = vector.broadcast %cst_4 : f32 to vector<1x1x256xf32>
    %11 = arith.mulf %9, %10 : vector<1x1x256xf32>
    %cst_5 = arith.constant 9.99999974E-6 : f32
    %12 = vector.broadcast %cst_5 : f32 to vector<1x1x256xf32>
    %13 = arith.addf %11, %12 : vector<1x1x256xf32>
    %14 = math.rsqrt %13 : vector<1x1x256xf32>
    %c0_6 = arith.constant 0 : index
    %c0_7 = arith.constant 0 : index
    %c0_8 = arith.constant 0 : index
    %15 = vector.load %arg3[%c0_6, %c0_7, %c0_8] : memref<1x32x1xf32, #tpu.memory_space<vmem>>, vector<1x32x1xf32>
    %c0_9 = arith.constant 0 : index
    %c0_10 = arith.constant 0 : index
    %c0_11 = arith.constant 0 : index
    %16 = vector.load %arg4[%c0_9, %c0_10, %c0_11] : memref<1x32x1xf32, #tpu.memory_space<vmem>>, vector<1x32x1xf32>
    %17 = vector.broadcast %14 : vector<1x1x256xf32> to vector<1x32x256xf32>
    %18 = arith.mulf %6, %17 : vector<1x32x256xf32>
    %19 = vector.broadcast %15 : vector<1x32x1xf32> to vector<1x32x256xf32>
    %20 = arith.mulf %18, %19 : vector<1x32x256xf32>
    %21 = vector.broadcast %16 : vector<1x32x1xf32> to vector<1x32x256xf32>
    %22 = arith.addf %20, %21 : vector<1x32x256xf32>
    %c0_12 = arith.constant 0 : index
    %c0_13 = arith.constant 0 : index
    %c0_14 = arith.constant 0 : index
    %23 = vector.load %arg5[%c0_12, %c0_13, %c0_14] : memref<1x32x256xf32, #tpu.memory_space<vmem>>, vector<1x32x256xf32>
    tpu.vector_store %arg5[%c0_12, %c0_13, %c0_14], %22 {strides = array<i32>} : memref<1x32x256xf32, #tpu.memory_space<vmem>>, vector<1x32x256xf32>,
    return
  }
  func.func @transform_0(%arg0: i32, %arg1: i32) -> (i32, i32, i32) {
    %c0_i32 = arith.constant 0 : i32
    %c0_i32_0 = arith.constant 0 : i32
    return %arg0, %c0_i32, %arg1 : i32, i32, i32
  }
  func.func @transform_1(%arg0: i32, %arg1: i32) -> (i32, i32, i32) {
    %c0_i32 = arith.constant 0 : i32
    %c0_i32_0 = arith.constant 0 : i32
    %c0_i32_1 = arith.constant 0 : i32
    %c0_i32_2 = arith.constant 0 : i32
    return %c0_i32, %c0_i32_0, %c0_i32_1 : i32, i32, i32
  }
  func.func @transform_2(%arg0: i32, %arg1: i32) -> (i32, i32, i32) {
    %c0_i32 = arith.constant 0 : i32
    %c0_i32_0 = arith.constant 0 : i32
    %c0_i32_1 = arith.constant 0 : i32
    %c0_i32_2 = arith.constant 0 : i32
    return %c0_i32, %c0_i32_0, %c0_i32_1 : i32, i32, i32
  }
  func.func @transform_3(%arg0: i32, %arg1: i32) -> (i32, i32, i32) {
    %c0_i32 = arith.constant 0 : i32
    %c0_i32_0 = arith.constant 0 : i32
    return %arg0, %c0_i32, %arg1 : i32, i32, i32
  }
}

</mosaic_0001>

<llo_original>
// kernel: tpu_custom_call.1
$region0: #{tpu_custom_call.1}
  #allocation0 [shape = 'u32[]', space=smem, size = 0x4, offset = 0x4, fixed_abs, tag = 'smem constant byte address 0x4 - core index']
  #allocation1 [shape = 'u32[144,128]{1,0:T(1,128)}', space=vmem, size = 0x12000, scoped, tag = 'internal scratch']
  %s0 = inlined_call_operand.hbm [shape: f32[2,32,256], index: 0, kind: input, shape index: {}]
  %s1 = inlined_call_operand.vmem [shape: f32[1,32,1], index: 1, kind: input, shape index: {}]
  %s2 = inlined_call_operand.vmem [shape: f32[1,32,1], index: 2, kind: input, shape index: {}]
  %s3 = inlined_call_operand.hbm [shape: f32[2,32,256], index: 3, kind: output, shape index: {}]
  %s4 = sld [smem:[#allocation0]]
  $region49: #{tpu_custom_call.1} parent=0
    _
  %s6 = ssub.s32 1, %s4
  %s7 = scalar_select 0, %s6, %s4
  $region1: #{tpu_custom_call.1} parent=0
    #allocation2 [shape = 'u8[65536]{0}', space=vmem, size = 0x10000, scoped, tag = 'input window, operand 0']
    #allocation3 [shape = 's32[2]{0}', space=sflag, size = 0x8, scoped, tag = 'scoped memory for tpu_custom_call.1']
    #allocation4 [shape = 's32[2]{0}', space=sflag, size = 0x8, scoped, tag = 'scoped memory for tpu_custom_call.1']
    #allocation5 [shape = 'u8[65536]{0}', space=vmem, size = 0x10000, scoped, tag = 'output window, operand 0']
    %8 = vsyncpa [#allocation3], 0
    %s9 = scalar_lea.sflag [#allocation3], 1
    %10 = vsyncpa %s9, 0
    %11 = vsyncpa [#allocation4], 0
    %s12 = scalar_lea.sflag [#allocation4], 1
    %13 = vsyncpa %s12, 0
    loop: start=0, step=1, limit=4
    $region2: #{tpu_custom_call.1} parent=1 // loop_pre_header
      _
    $region3: #{tpu_custom_call.1} parent=1 // loop_header
      %s15 = sphi 0, %s19
      %p16 = scmp.ge.s32.totalorder %s15, 4
      %s22 = sphi 0, %s34
      %s23 = sphi 0, %s30
      %s24 = sphi 0, %s22
      %s25 = sphi 0, %s23
      %s26 = sphi 0, %s24
      %s27 = sphi 0, %s25
      %s39 = sphi 0, %s41
      %s42 = sphi 0, %s39
      %s43 = sphi 0, %s42
      %s59 = sphi 0, %s43
      %s63 = sphi 0, %s63
      %s65 = sphi 0, %s63
      %s66 = sphi 0, %s65
      %s80 = sphi 0, %s66
      %s84 = sphi 0, %s84
      %s86 = sphi 0, %s84
      %s87 = sphi 0, %s86
      %s101 = sphi 0, %s87
      %s109 = sphi 0, %s111
      %s112 = sphi 0, %s109
      %s113 = sphi 0, %s112
      %s129 = sphi 0, %s113
    $region4: #{tpu_custom_call.1} parent=1 // loop_header_branch
      %18 = sbr.rel (%p16) target = $region8
    $region5: #{tpu_custom_call.1} parent=1 // loop_body
      %s20 = ssub.s32 %s15, 1
      %s21 = ssub.s32 %s15, 2
      %s28 = sadd.s32 1, %s23
      %p29 = scmp.ge.s32.totalorder %s28, 1
      %s30 = scalar_select %p29, 0, %s28
      %s31 = sadd.s32 1, %s22
      %s32 = scalar_select %p29, %s31, %s22
      %p33 = scmp.ge.s32.totalorder %s32, 2
      %s34 = scalar_select %p33, 0, %s32
      %s35 = ssub.s32 %s22, %s34
      %s36 = ssub.s32 %s23, %s30
      %s37 = sor.u32 %s35, %s36
      %p38 = scmp.eq.s32.totalorder %s37, 0
      %s40 = sadd.s32 %s39, 1
      %s41 = scalar_select %p38, %s39, %s40
      %p44 = pneg %p38
      %p45 = scmp.eq.s32.totalorder %s15, 1
      %p46 = por %p44, %p45
      %p47 = scmp.ne.s32.totalorder %s39, %s42
      %p48 = scmp.eq.s32.totalorder %s15, 0
      %p49 = por %p47, %p48
      %p50 = scmp.ne.s32.totalorder %s39, %s42
      %p51 = scmp.eq.s32.totalorder %s20, 1
      %p52 = por %p50, %p51
      %p53 = scmp.ne.s32.totalorder %s42, %s43
      %p54 = scmp.eq.s32.totalorder %s20, 0
      %p55 = por %p53, %p54
      %p56 = scmp.ne.s32.totalorder %s42, %s43
      %p57 = scmp.eq.s32.totalorder %s21, 1
      %p58 = por %p56, %p57
      %p60 = scmp.ne.s32.totalorder %s43, %s59
      %p61 = scmp.eq.s32.totalorder %s21, 0
      %p62 = por %p60, %p61
      %s64 = sadd.s32 %s63, 1
      %p67 = scmp.eq.s32.totalorder %s15, 1
      %p68 = scmp.ne.s32.totalorder %s63, %s65
      %p69 = scmp.eq.s32.totalorder %s15, 0
      %p70 = por %p68, %p69
      %p71 = scmp.ne.s32.totalorder %s63, %s65
      %p72 = scmp.eq.s32.totalorder %s20, 1
      %p73 = por %p71, %p72
      %p74 = scmp.ne.s32.totalorder %s65, %s66
      %p75 = scmp.eq.s32.totalorder %s20, 0
      %p76 = por %p74, %p75
      %p77 = scmp.ne.s32.totalorder %s65, %s66
      %p78 = scmp.eq.s32.totalorder %s21, 1
      %p79 = por %p77, %p78
      %p81 = scmp.ne.s32.totalorder %s66, %s80
      %p82 = scmp.eq.s32.totalorder %s21, 0
      %p83 = por %p81, %p82
      %s85 = sadd.s32 %s84, 1
      %p88 = scmp.eq.s32.totalorder %s15, 1
      %p89 = scmp.ne.s32.totalorder %s84, %s86
      %p90 = scmp.eq.s32.totalorder %s15, 0
      %p91 = por %p89, %p90
      %p92 = scmp.ne.s32.totalorder %s84, %s86
      %p93 = scmp.eq.s32.totalorder %s20, 1
      %p94 = por %p92, %p93
      %p95 = scmp.ne.s32.totalorder %s86, %s87
      %p96 = scmp.eq.s32.totalorder %s20, 0
      %p97 = por %p95, %p96
      %p98 = scmp.ne.s32.totalorder %s86, %s87
      %p99 = scmp.eq.s32.totalorder %s21, 1
      %p100 = por %p98, %p99
      %p102 = scmp.ne.s32.totalorder %s87, %s101
      %p103 = scmp.eq.s32.totalorder %s21, 0
      %p104 = por %p102, %p103
      %s105 = ssub.s32 %s22, %s34
      %s106 = ssub.s32 %s23, %s30
      %s107 = sor.u32 %s105, %s106
      %p108 = scmp.eq.s32.totalorder %s107, 0
      %s110 = sadd.s32 %s109, 1
      %s111 = scalar_select %p108, %s109, %s110
      %p114 = pneg %p108
      %p115 = scmp.eq.s32.totalorder %s15, 1
      %p116 = por %p114, %p115
      %p117 = scmp.ne.s32.totalorder %s109, %s112
      %p118 = scmp.eq.s32.totalorder %s15, 0
      %p119 = por %p117, %p118
      %p120 = scmp.ne.s32.totalorder %s109, %s112
      %p121 = scmp.eq.s32.totalorder %s20, 1
      %p122 = por %p120, %p121
      %p123 = scmp.ne.s32.totalorder %s112, %s113
      %p124 = scmp.eq.s32.totalorder %s20, 0
      %p125 = por %p123, %p124
      %p126 = scmp.ne.s32.totalorder %s112, %s113
      %p127 = scmp.eq.s32.totalorder %s21, 1
      %p128 = por %p126, %p127
      %p130 = scmp.ne.s32.totalorder %s113, %s129
      %p131 = scmp.eq.s32.totalorder %s21, 0
      %p132 = por %p130, %p131
      %p133 = scmp.le.s32.totalorder 1, %s15
      %p134 = scmp.lt.s32.totalorder %s15, 3
      %p135 = pnand %p133, %p134
      %p136 = pneg %p135
      // Predicated region
      $region9: #{tpu_custom_call.1} parent=5 // pred_check
        _
      $region10: #{tpu_custom_call.1} parent=5 // pred_check_branch
        %138 = sbr.rel (%p135) target = $region12
      $region11: #{tpu_custom_call.1} parent=5 // pred_region
        %s139 = ssub.s32 %s15, 1
        // Predicated region
        $region13: #{tpu_custom_call.1} parent=11 // pred_check
          %p140 = pneg %p76
        $region14: #{tpu_custom_call.1} parent=11 // pred_check_branch
          %142 = sbr.rel (%p140) target = $region16
        $region15: #{tpu_custom_call.1} parent=11 // pred_region
          _
        $region16: #{tpu_custom_call.1} parent=11 // pred_fallthru
          _
        // Predicated region
        $region17: #{tpu_custom_call.1} parent=11 // pred_check
          %p143 = pneg %p97
        $region18: #{tpu_custom_call.1} parent=11 // pred_check_branch
          %145 = sbr.rel (%p143) target = $region20
        $region19: #{tpu_custom_call.1} parent=11 // pred_region
          _
        $region20: #{tpu_custom_call.1} parent=11 // pred_fallthru
          _
      $region12: #{tpu_custom_call.1} parent=5 // pred_fallthru
        _
      %p146 = scmp.lt.s32.totalorder %s15, 2
      // Predicated region
      $region21: #{tpu_custom_call.1} parent=5 // pred_check
        %p147 = pneg %p146
      $region22: #{tpu_custom_call.1} parent=5 // pred_check_branch
        %149 = sbr.rel (%p147) target = $region24
      $region23: #{tpu_custom_call.1} parent=5 // pred_region
        // Predicated region
        $region25: #{tpu_custom_call.1} parent=23 // pred_check
          %p150 = pneg %p49
        $region26: #{tpu_custom_call.1} parent=23 // pred_check_branch
          %152 = sbr.rel (%p150) target = $region28
        $region27: #{tpu_custom_call.1} parent=23 // pred_region
          %s153 = sand.u32 %s39, 1
          %s154 = scalar_lea.sflag [#allocation3], %s153
          %s155 = sand.u32 %s39, 1
          %s156 = smul.addr %s155, 64
          %s157 = scalar_lea.vmem [#allocation2], %s156
          %s158 = smul.u32 2, %s23
          %s160 = ssub.s32 1024, 1024
          %161 = vsyncadd %s154, %s160
          %s162 = smul.addr %s22, 8
          %s163 = sadd.s32 %s158, %s162
          %s164 = smul.addr %s163, 128
          %s165 = scalar_lea.hbm %s0, %s164
          %s166 = sshll.u32 %s157, 4
          %s167 = int_to_ptr.vmem [resolvable:$true] %s166
          %172 = dma.hbm_to_vmem [thread:$0]  %s165, 1024, %s167, %s154, 256, 256, 16
        $region28: #{tpu_custom_call.1} parent=23 // pred_fallthru
          _
      $region24: #{tpu_custom_call.1} parent=5 // pred_fallthru
        _
      %p173 = scmp.le.s32.totalorder 1, %s15
      %p174 = scmp.lt.s32.totalorder %s15, 3
      %p175 = pnand %p173, %p174
      %p176 = pneg %p175
      // Predicated region
      $region29: #{tpu_custom_call.1} parent=5 // pred_check
        _
      $region30: #{tpu_custom_call.1} parent=5 // pred_check_branch
        %178 = sbr.rel (%p175) target = $region32
      $region31: #{tpu_custom_call.1} parent=5 // pred_region
        %s179 = ssub.s32 %s15, 1
        %s180 = sand.u32 %s42, 1
        %s181 = scalar_lea.sflag [#allocation3], %s180
        %s182 = sand.u32 %s42, 1
        %s183 = smul.addr %s182, 64
        %s184 = scalar_lea.vmem [#allocation2], %s183
        // Predicated region
        $region33: #{tpu_custom_call.1} parent=31 // pred_check
          %p185 = pneg %p55
        $region34: #{tpu_custom_call.1} parent=31 // pred_check_branch
          %187 = sbr.rel (%p185) target = $region36
        $region35: #{tpu_custom_call.1} parent=31 // pred_region
          %188 = dma.done %s181, 1024
        $region36: #{tpu_custom_call.1} parent=31 // pred_fallthru
          _
        %s189 = sand.u32 %s42, 1
        %s190 = scalar_lea.sflag [#allocation3], %s189
        %s191 = sand.u32 %s42, 1
        %s192 = smul.addr %s191, 64
        %s193 = scalar_lea.vmem [#allocation2], %s192
        %p194 = pneg %p55
        %p195 = pneg %p52
        %p196 = pneg %p76
        %p197 = pneg %p73
        %p198 = pneg %p97
        %p199 = pneg %p94
        %p200 = pneg %p125
        %p201 = pneg %p122
        %s202 = sand.u32 %s112, 1
        %s203 = scalar_lea.sflag [#allocation4], %s202
        %s204 = sand.u32 %s112, 1
        %s205 = smul.addr %s204, 64
        %s206 = scalar_lea.vmem [#allocation5], %s205
        %s207 = smul.u32 2, %s25
        %s208 = smul.u32 2, %s25
        %v209 = vld [vmem:[%s184] sm:$0xff]
        %v210 = vld [vmem:[%s184 + $0x8] sm:$0xff]
        %v211 = vld [vmem:[%s184 + $0x10] sm:$0xff]
        %v212 = vld [vmem:[%s184 + $0x18] sm:$0xff]
        %v213 = vld [vmem:[%s184 + $0x20] sm:$0xff]
        %v214 = vld [vmem:[%s184 + $0x28] sm:$0xff]
        %v215 = vld [vmem:[%s184 + $0x30] sm:$0xff]
        %v216 = vld [vmem:[%s184 + $0x38] sm:$0xff]
        %v217 = vadd.f32 %v209, %v211
        %v218 = vadd.f32 %v217, %v213
        %v219 = vadd.f32 %v218, %v215
        %v220 = vrot.slane %v219, 4
        %v221 = vadd.f32 %v219, %v220
        %v222 = vrot.slane %v221, 2
        %v223 = vadd.f32 %v221, %v222
        %v224 = vrot.slane %v223, 1
        %v225 = vadd.f32 %v223, %v224
        %v226 = vadd.f32 %v210, %v212
        %v227 = vadd.f32 %v226, %v214
        %v228 = vadd.f32 %v227, %v216
        %v229 = vrot.slane %v228, 4
        %v230 = vadd.f32 %v228, %v229
        %v231 = vrot.slane %v230, 2
        %v232 = vadd.f32 %v230, %v231
        %v233 = vrot.slane %v232, 1
        %v234 = vadd.f32 %v232, %v233
        %v235 = vmul.f32 %v225, 0.03125
        %v236 = vmul.f32 %v234, 0.03125
        %v237 = vsub.f32 %v209, %v235
        %v238 = vsub.f32 %v210, %v236
        %v239 = vsub.f32 %v211, %v235
        %v240 = vsub.f32 %v212, %v236
        %v241 = vsub.f32 %v213, %v235
        %v242 = vsub.f32 %v214, %v236
        %v243 = vsub.f32 %v215, %v235
        %v244 = vsub.f32 %v216, %v236
        %v245 = vmul.f32 %v237, %v237
        %v246 = vmul.f32 %v238, %v238
        %v247 = vmul.f32 %v239, %v239
        %v248 = vmul.f32 %v240, %v240
        %v249 = vmul.f32 %v241, %v241
        %v250 = vmul.f32 %v242, %v242
        %v251 = vmul.f32 %v243, %v243
        %v252 = vmul.f32 %v244, %v244
        %v253 = vadd.f32 %v245, %v247
        %v254 = vadd.f32 %v253, %v249
        %v255 = vadd.f32 %v254, %v251
        %v256 = vrot.slane %v255, 4
        %v257 = vadd.f32 %v255, %v256
        %v258 = vrot.slane %v257, 2
        %v259 = vadd.f32 %v257, %v258
        %v260 = vrot.slane %v259, 1
        %v261 = vadd.f32 %v259, %v260
        %v262 = vadd.f32 %v246, %v248
        %v263 = vadd.f32 %v262, %v250
        %v264 = vadd.f32 %v263, %v252
        %v265 = vrot.slane %v264, 4
        %v266 = vadd.f32 %v264, %v265
        %v267 = vrot.slane %v266, 2
        %v268 = vadd.f32 %v266, %v267
        %v269 = vrot.slane %v268, 1
        %v270 = vadd.f32 %v268, %v269
        %v271 = vmul.f32 %v261, 0.03125
        %v272 = vmul.f32 %v270, 0.03125
        %v273 = vadd.f32 %v271, 1e-05
        %v274 = vadd.f32 %v272, 1e-05
        %v275 = vrsqrt.pop %v273
        %v276 = vrsqrt.pop %v274
        %v277 = vld [vmem:[%s1] sm:$0xff]
        %v278 = vld [vmem:[%s1 + $0x8] sm:$0xff]
        %v279 = vld [vmem:[%s1 + $0x10] sm:$0xff]
        %v280 = vld [vmem:[%s1 + $0x18] sm:$0xff]
        %v281 = vld [vmem:[%s2] sm:$0xff]
        %v282 = vld [vmem:[%s2 + $0x8] sm:$0xff]
        %v283 = vld [vmem:[%s2 + $0x10] sm:$0xff]
        %v284 = vld [vmem:[%s2 + $0x18] sm:$0xff]
        %v285 = vmul.f32 %v237, %v275
        %v286 = vmul.f32 %v238, %v276
        %v287 = vmul.f32 %v239, %v275
        %v288 = vmul.f32 %v240, %v276
        %v289 = vmul.f32 %v241, %v275
        %v290 = vmul.f32 %v242, %v276
        %v291 = vmul.f32 %v243, %v275
        %v292 = vmul.f32 %v244, %v276
        %294 = vset.pattern.permute.xlu0 0
        %295 = vperm.xlu0 %294, %v277
        %v296 = vpop.permute.xlu0 %295
        %299 = vset.pattern.permute.xlu0 0
        %300 = vperm.xlu0 %299, %v278
        %v301 = vpop.permute.xlu0 %300
        %304 = vset.pattern.permute.xlu0 0
        %305 = vperm.xlu0 %304, %v279
        %v306 = vpop.permute.xlu0 %305
        %309 = vset.pattern.permute.xlu0 0
        %310 = vperm.xlu0 %309, %v280
        %v311 = vpop.permute.xlu0 %310
        %v313 = vmul.f32 %v285, %v296
        %v314 = vmul.f32 %v286, %v296
        %v315 = vmul.f32 %v287, %v301
        %v316 = vmul.f32 %v288, %v301
        %v317 = vmul.f32 %v289, %v306
        %v318 = vmul.f32 %v290, %v306
        %v319 = vmul.f32 %v291, %v311
        %v320 = vmul.f32 %v292, %v311
        %322 = vset.pattern.permute.xlu0 0
        %323 = vperm.xlu0 %322, %v281
        %v324 = vpop.permute.xlu0 %323
        %327 = vset.pattern.permute.xlu0 0
        %328 = vperm.xlu0 %327, %v282
        %v329 = vpop.permute.xlu0 %328
        %332 = vset.pattern.permute.xlu0 0
        %333 = vperm.xlu0 %332, %v283
        %v334 = vpop.permute.xlu0 %333
        %337 = vset.pattern.permute.xlu0 0
        %338 = vperm.xlu0 %337, %v284
        %v339 = vpop.permute.xlu0 %338
        %v341 = vadd.f32 %v313, %v324
        %v342 = vadd.f32 %v314, %v324
        %v343 = vadd.f32 %v315, %v329
        %v344 = vadd.f32 %v316, %v329
        %v345 = vadd.f32 %v317, %v334
        %v346 = vadd.f32 %v318, %v334
        %v347 = vadd.f32 %v319, %v339
        %v348 = vadd.f32 %v320, %v339
        %349 = vst [vmem:[%s206] sm:$0xff] %v341
        %350 = vst [vmem:[%s206 + $0x8] sm:$0xff] %v342
        %351 = vst [vmem:[%s206 + $0x10] sm:$0xff] %v343
        %352 = vst [vmem:[%s206 + $0x18] sm:$0xff] %v344
        %353 = vst [vmem:[%s206 + $0x20] sm:$0xff] %v345
        %354 = vst [vmem:[%s206 + $0x28] sm:$0xff] %v346
        %355 = vst [vmem:[%s206 + $0x30] sm:$0xff] %v347
        %356 = vst [vmem:[%s206 + $0x38] sm:$0xff] %v348
        %s357 = sand.u32 %s112, 1
        %s358 = scalar_lea.sflag [#allocation4], %s357
        %s359 = sand.u32 %s112, 1
        %s360 = smul.addr %s359, 64
        %s361 = scalar_lea.vmem [#allocation5], %s360
        // Predicated region
        $region37: #{tpu_custom_call.1} parent=31 // pred_check
          %p362 = pneg %p122
        $region38: #{tpu_custom_call.1} parent=31 // pred_check_branch
          %364 = sbr.rel (%p362) target = $region40
        $region39: #{tpu_custom_call.1} parent=31 // pred_region
          %s365 = smul.u32 2, %s25
          %s367 = ssub.s32 1024, 1024
          %368 = vsyncadd %s358, %s367
          %s369 = smul.addr %s24, 8
          %s370 = sadd.s32 %s365, %s369
          %s371 = smul.addr %s370, 128
          %s372 = scalar_lea.hbm %s3, %s371
          %s373 = sshll.u32 %s361, 4
          %s374 = int_to_ptr.vmem [resolvable:$true] %s373
          %379 = dma.vmem_to_hbm [thread:$0]  %s374, 1024, %s372, %s358, 256, 256, 16
        $region40: #{tpu_custom_call.1} parent=31 // pred_fallthru
          _
      $region32: #{tpu_custom_call.1} parent=5 // pred_fallthru
        _
      %p380 = scmp.le.s32.totalorder 2, %s15
      // Predicated region
      $region41: #{tpu_custom_call.1} parent=5 // pred_check
        %p381 = pneg %p380
      $region42: #{tpu_custom_call.1} parent=5 // pred_check_branch
        %383 = sbr.rel (%p381) target = $region44
      $region43: #{tpu_custom_call.1} parent=5 // pred_region
        %s384 = ssub.s32 %s15, 2
        // Predicated region
        $region45: #{tpu_custom_call.1} parent=43 // pred_check
          %p385 = pneg %p128
        $region46: #{tpu_custom_call.1} parent=43 // pred_check_branch
          %387 = sbr.rel (%p385) target = $region48
        $region47: #{tpu_custom_call.1} parent=43 // pred_region
          %s388 = sand.u32 %s113, 1
          %s389 = scalar_lea.sflag [#allocation4], %s388
          %s390 = sand.u32 %s113, 1
          %s391 = smul.addr %s390, 64
          %s392 = scalar_lea.vmem [#allocation5], %s391
          %393 = dma.done %s389, 1024
        $region48: #{tpu_custom_call.1} parent=43 // pred_fallthru
          _
      $region44: #{tpu_custom_call.1} parent=5 // pred_fallthru
        _
    $region6: #{tpu_custom_call.1} parent=1 // loop_footer
      %s19 = sadd.s32 1, %s15
    $region7: #{tpu_custom_call.1} parent=1 // loop_footer_branch
      %14 = sbr.rel target = $region3
    $region8: #{tpu_custom_call.1} parent=1 // loop_exit
      _
    %394 = vsyncpa [#allocation3], 1
    %s395 = scalar_lea.sflag [#allocation3], 1
    %396 = vsyncpa %s395, 1
    %397 = vsyncpa [#allocation4], 1
    %s398 = scalar_lea.sflag [#allocation4], 1
    %399 = vsyncpa %s398, 1

</llo_original>
